<compile_context>
chip_gen: v7x
topology: tpu7x:2x2x1
jax: 0.10.0
libtpu: 0.0.40
codegen_flags: <defaults>
</compile_context>

<pallas_src>
import functools

import numpy as np
import jax
import jax.numpy as jnp
from jax.experimental import pallas as pl
from jax.experimental.pallas import tpu as pltpu


# ----------------------------- kernels -----------------------------------------


def _acos_f32(x):
    # acos via Abramowitz & Stegun 4.4.45 polynomial (|err| < 2e-8).  Uses only
    # mul/add/sqrt/select, which always lower on Mosaic (lax.acos decomposes to
    # atan2, which is not guaranteed to have a TPU lowering).
    ax = jnp.abs(x)
    p = jnp.float32(-0.0012624911)
    p = p * ax + jnp.float32(0.0066700901)
    p = p * ax + jnp.float32(-0.0170881256)
    p = p * ax + jnp.float32(0.0308918810)
    p = p * ax + jnp.float32(-0.0501743046)
    p = p * ax + jnp.float32(0.0889789874)
    p = p * ax + jnp.float32(-0.2145988016)
    p = p * ax + jnp.float32(1.5707963050)
    r = jnp.sqrt(jnp.maximum(1.0 - ax, 0.0)) * p
    return jnp.where(x < 0.0, jnp.float32(np.pi) - r, r)


def _pass1_kernel(target_ref, logits_ref, prior_ref, theta_ref, ce_ref,
                  *, s, num_experts):
    """Per B-tile: per-sample theta_yi and CE_i for every expert."""
    tgt = target_ref[...]                                   # (TB, 1) i32
    tb = tgt.shape[0]
    c = logits_ref.shape[-1]

    # shared bool target mask (no materialised f32 one-hot)
    col = jax.lax.broadcasted_iota(jnp.int32, (tb, c), 1)
    tgt_mask = col == tgt                                    # (TB, C)

    inv_s = jnp.float32(1.0 / s)
    thetas = []
    ces = []
    for e in range(num_experts):                             # E small & static -> unrolled
        logits = logits_ref[e].astype(jnp.float32)           # upcast right after load
        log_prior = prior_ref[e].astype(jnp.float32)          # (1, C)
        adj = logits + log_prior                              # prior-adjusted logits

        # "gathers" via masked lane reductions
        w_yi = jnp.sum(jnp.where(tgt_mask, logits, 0.0), axis=1, keepdims=True)
        adj_t = jnp.sum(jnp.where(tgt_mask, adj, 0.0), axis=1, keepdims=True)

        # cross-entropy without materialising log-softmax: CE = lse(adj) - adj[target]
        mx = jnp.max(adj, axis=1, keepdims=True)
        lse = mx + jnp.log(jnp.sum(jnp.exp(adj - mx), axis=1, keepdims=True))

        thetas.append(_acos_f32(w_yi * inv_s))                # (TB, 1)
        ces.append(lse - adj_t)                               # (TB, 1)

    theta_ref[...] = jnp.concatenate(thetas, axis=1)          # (TB, E) single store
    ce_ref[...] = jnp.concatenate(ces, axis=1)                # (TB, E) single store


def _pass2_kernel(theta_ref, ce_ref, masks_ref, out_ref, *, num_experts, inv_b):
    """Trivial epilogue on ~B*E elements: region means, delta, scalar loss."""
    theta = theta_ref[...]                                    # (B, E) f32
    ce = ce_ref[...]                                          # (B, E) f32
    masks = masks_ref[...]                                    # (B, R) f32, disjoint regions

    reg_cnt = jnp.sum(masks, axis=0, keepdims=True)           # (1, R)
    # guard empty regions (0/0 -> NaN in a naive mean); the masked where below never
    # selects lanes of an empty region, so the observable output still matches torch.
    inv_cnt = pl.reciprocal(jnp.maximum(reg_cnt, 1.0), approx=False)

    acc = jnp.zeros((theta.shape[0], 1), jnp.float32)
    for e in range(num_experts):
        th = theta[:, e:e + 1]                                # (B, 1)
        reg_mean = jnp.sum(masks * th, axis=0, keepdims=True) * inv_cnt      # (1, R)
        dth = jnp.sum(jnp.where(masks > 0.0, th - reg_mean, 0.0),
                      axis=1, keepdims=True)                  # (B, 1)
        delta = jnp.where(dth < 0.0, 1.0, 1.0 + dth)          # (B, 1)
        acc = acc + ce[:, e:e + 1] * delta

    out_ref[...] = jnp.sum(acc, axis=0, keepdims=True) * jnp.float32(inv_b)


# ----------------------------- wrapper ------------------------------------------


def diverse_expert_loss(expert_logits, target, region_masks_f, prior_adj, s, *, tb=None):
    """expert_logits (E,B,C) f32 or bf16 (shipped untouched - no wrapper pad/cast),
    target (B,) int, region_masks_f (B,R) disjoint region masks,
    prior_adj (E,C) f32 per-expert additive log-prior."""
    E, B, C = expert_logits.shape
    R = region_masks_f.shape[1]
    itemsize = np.dtype(expert_logits.dtype).itemsize

    # ---- B-tile size: keep the live footprint ~24 MiB so it fits every generation
    # (v5e 16 MiB scoped default is raised below; v7x physical is 64 MiB).
    c_al = 128 * pl.cdiv(C, 128)                              # internal lane-padded C
    per_row = 2 * E * c_al * itemsize + 4 * c_al * 4          # db logits + ~4 f32 temps
    if tb is None:
        tb = int((24 * 1024 * 1024) // per_row)
    if tb >= B:
        tb = B
    else:
        tb = min(max(8, (tb // 8) * 8), B)
    grid = (pl.cdiv(B, tb),)

    vmem_bytes = (per_row * tb + 2 * E * c_al * 4 + 8 * tb * (1 + 2 * E) + (2 << 20))
    vmem_bytes = int(min(max(vmem_bytes, 8 << 20), 64 << 20))

    target_2d = target.reshape(B, 1).astype(jnp.int32)
    prior_3d = prior_adj.astype(jnp.float32).reshape(E, 1, C)

    # ---- pass 1: B-tiled, pipelined, parallel across TensorCores -----------------
    p1 = functools.partial(_pass1_kernel, s=float(s), num_experts=E)
    theta, ce = pl.pallas_call(
        p1,
        out_shape=(jax.ShapeDtypeStruct((B, E), jnp.float32),
                   jax.ShapeDtypeStruct((B, E), jnp.float32)),
        grid=grid,
        in_specs=[
            pl.BlockSpec((tb, 1), lambda i: (i, 0)),          # target tile
            pl.BlockSpec((E, tb, C), lambda i: (0, i, 0)),    # logits tile (streamed)
            pl.BlockSpec((E, 1, C), lambda i: (0, 0, 0)),     # log-prior (resident)
        ],
        out_specs=(pl.BlockSpec((tb, E), lambda i: (i, 0)),
                   pl.BlockSpec((tb, E), lambda i: (i, 0))),
        compiler_params=pltpu.CompilerParams(
            dimension_semantics=("parallel",),
            vmem_limit_bytes=vmem_bytes),
        cost_estimate=pl.CostEstimate(
            flops=10 * E * B * C,
            transcendentals=E * B * C,
            bytes_accessed=E * B * C * itemsize + B * (4 + 8 * E) + E * C * 4),
    )(target_2d, expert_logits, prior_3d)

    # ---- pass 2: tiny epilogue (region means, delta, scalar) ----------------------
    p2 = functools.partial(_pass2_kernel, num_experts=E, inv_b=1.0 / B)
    out = pl.pallas_call(
        p2,
        out_shape=jax.ShapeDtypeStruct((1, 1), jnp.float32),
        in_specs=[pl.BlockSpec(memory_space=pltpu.MemorySpace.VMEM)] * 3,
        out_specs=pl.BlockSpec(memory_space=pltpu.MemorySpace.VMEM),
    )(theta, ce, region_masks_f.astype(jnp.float32))
    return out[0, 0]


# ----------------------------- host-side glue (mirrors __init__) ----------------


def get_region_points(cls_num_list, num_experts):
    region_num = int(np.sum(cls_num_list)) // (num_experts - 1)
    sort_list = np.sort(np.asarray(cls_num_list))
    region_points = []
    now_sum = 0
    for v in sort_list:
        now_sum += int(v)
        if now_sum > region_num:
            region_points.append(int(v))
            now_sum = 0
    region_points = list(reversed(region_points))
    region_left_right = []
    for i in range(len(region_points)):
        if i == 0:
            region_left_right.append([region_points[i], int(np.max(cls_num_list))])
        else:
            region_left_right.append([region_points[i], region_points[i - 1]])
    region_left_right.append([0, region_points[-1]])
    return region_left_right


def reference_loss(expert_logits, target, cls_num, region_points, mask_cls,
                   prior, s, tau):
    """Pure-JAX mirror of DiverseExpertLoss.forward (extra_info path)."""
    E, B, C = expert_logits.shape
    target_num = cls_num[target]
    masks = [(target_num > lo) & (target_num <= hi) for lo, hi in region_points]
    loss = 0.0
    for ind in range(E):
        logits = expert_logits[ind]
        one_hot = jax.nn.one_hot(target, C, dtype=jnp.float32)
        w_yi = jnp.sum(one_hot * logits, axis=1)
        theta = jnp.arccos(w_yi / s)
        delta_theta = jnp.zeros_like(theta)
        for i in range(E - 1):
            m = masks[i]
            mean_i = jnp.sum(jnp.where(m, theta, 0.0)) / jnp.sum(m)
            delta_theta = jnp.where(m, theta - mean_i, delta_theta)
        delta_theta = jnp.where(delta_theta < 0.0, 1.0, 1.0 + delta_theta)
        oh = one_hot * delta_theta[:, None]
        if ind != E - 1:
            p = jnp.where(mask_cls[ind], prior, jnp.full_like(prior, prior.max()))
            adj = logits + jnp.log(p + 1e-9)
        else:
            adj = logits + jnp.log(prior + 1e-9) * tau
        logp = jax.nn.log_softmax(adj, axis=1)
        loss = loss + (-jnp.sum(logp * oh, axis=1)).mean()
    return loss


if __name__ == "__main__":
    num_experts = 3
    s = 30.0
    tau = 3.0
    B, C = 8, 16

    # long-tailed class counts; chosen so the greedy grouping yields exactly
    # num_experts - 1 = 2 regions (as the torch module implicitly requires)
    cls_num_list = [max(1, int(1000 * (0.7 ** i))) for i in range(C)]
    region_points = get_region_points(cls_num_list, num_experts)
    assert len(region_points) == num_experts - 1

    cls_num = np.asarray(cls_num_list, dtype=np.int64)
    prior = (cls_num / cls_num.sum()).astype(np.float32)
    mask_cls = [(cls_num > lo) & (cls_num <= hi) for lo, hi in region_points]

    # per-expert additive log-prior table (deterministic "parameter" setup)
    prior_adj = np.zeros((num_experts, C), dtype=np.float32)
    for e in range(num_experts - 1):
        p = np.full((C,), prior.max(), dtype=np.float32)
        p[mask_cls[e]] = prior[mask_cls[e]]
        prior_adj[e] = np.log(p + 1e-9)
    prior_adj[num_experts - 1] = np.log(prior + 1e-9) * tau

    key = jax.random.PRNGKey(0)
    k1, k2 = jax.random.split(key)
    expert_logits = jax.random.normal(k1, (num_experts, B, C), dtype=jnp.float32)
    target = jax.random.randint(k2, (B,), 0, C, dtype=jnp.int32)
    target = target.at[0].set(0)  # keep the head region non-empty

    # per-sample region masks (forward-pass glue, derived from integer class counts)
    target_num = cls_num[np.asarray(target)]
    region_masks = np.stack(
        [((target_num > lo) & (target_num <= hi)).astype(np.float32)
         for lo, hi in region_points], axis=1)  # (B, R)
    # the delta_theta formulation assumes strictly disjoint regions (matches torch)
    assert np.all(region_masks.sum(axis=1) <= 1.0)

    ref = reference_loss(expert_logits, target, jnp.asarray(cls_num),
                         region_points,
                         [jnp.asarray(m) for m in mask_cls],
                         jnp.asarray(prior), s, tau)

    # f32 path: bit-for-bit semantics of the module, tight tolerance
    loss_f32 = diverse_expert_loss(expert_logits, target,
                                   jnp.asarray(region_masks),
                                   jnp.asarray(prior_adj), s)
    loss_f32 = jax.block_until_ready(loss_f32)
    np.testing.assert_allclose(np.asarray(loss_f32), np.asarray(ref),
                               rtol=1e-4, atol=1e-4)

    # bf16 logits from the producer: halves HBM bytes of the streamed logits;
    # no wrapper-side cast - the kernel upcasts after the VMEM load.
    loss_bf16 = diverse_expert_loss(expert_logits.astype(jnp.bfloat16), target,
                                    jnp.asarray(region_masks),
                                    jnp.asarray(prior_adj), s)
    loss_bf16 = jax.block_until_ready(loss_bf16)
    np.testing.assert_allclose(np.asarray(loss_bf16), np.asarray(ref),
                               rtol=5e-2, atol=5e-2)

    print("KERNEL_OK")
</pallas_src>

<mosaic_0001>
module attributes {stable_mosaic.version = 11 : i64} {
  func.func @_pass1_kernel(%arg0: i32, %arg1: memref<8x1xi32, #tpu.memory_space<vmem>>, %arg2: memref<3x8x16xf32, #tpu.memory_space<vmem>>, %arg3: memref<3x1x16xf32, #tpu.memory_space<vmem>>, %arg4: memref<8x3xf32, #tpu.memory_space<vmem>>, %arg5: memref<8x3xf32, #tpu.memory_space<vmem>>) attributes {dimension_semantics = [#tpu.dimension_semantics<parallel>], iteration_bounds = array<i64: 1>, scalar_prefetch = 0 : i64, scratch_operands = 0 : i64, tpu.core_type = #tpu.core_type<tc>, window_params = [{transform_indices = @transform_0, window_bounds = array<i64: 8, 1>}, {transform_indices = @transform_1, window_bounds = array<i64: 3, 8, 16>}, {pipeline_mode = #tpu.pipeline_mode<synchronous>, transform_indices = @transform_2, window_bounds = array<i64: 3, 1, 16>}, {transform_indices = @transform_3, window_bounds = array<i64: 8, 3>}, {transform_indices = @transform_4, window_bounds = array<i64: 8, 3>}]} {
    %c0 = arith.constant 0 : index
    %c0_0 = arith.constant 0 : index
    %0 = vector.load %arg1[%c0, %c0_0] : memref<8x1xi32, #tpu.memory_space<vmem>>, vector<8x1xi32>
    %1 = tpu.iota {dimensions = array<i32: 1>} : vector<8x16xi32>
    %2 = vector.broadcast %0 : vector<8x1xi32> to vector<8x16xi32>
    %3 = arith.cmpi eq, %1, %2 : vector<8x16xi32>
    %c0_1 = arith.constant 0 : index
    %c0_2 = arith.constant 0 : index
    %c0_3 = arith.constant 0 : index
    %4 = vector.load %arg2[%c0_1, %c0_2, %c0_3] : memref<3x8x16xf32, #tpu.memory_space<vmem>>, vector<1x8x16xf32>
    %5 = vector.shape_cast %4 : vector<1x8x16xf32> to vector<8x16xf32>
    %c0_4 = arith.constant 0 : index
    %c0_5 = arith.constant 0 : index
    %c0_6 = arith.constant 0 : index
    %6 = vector.load %arg3[%c0_4, %c0_5, %c0_6] : memref<3x1x16xf32, #tpu.memory_space<vmem>>, vector<1x1x16xf32>
    %7 = vector.shape_cast %6 : vector<1x1x16xf32> to vector<1x16xf32>
    %8 = vector.broadcast %7 : vector<1x16xf32> to vector<8x16xf32>
    %9 = arith.addf %5, %8 : vector<8x16xf32>
    %cst = arith.constant 0.000000e+00 : f32
    %10 = vector.broadcast %cst : f32 to vector<8x16xf32>
    %11 = arith.select %3, %5, %10 : vector<8x16xi1>, vector<8x16xf32>
    %cst_7 = arith.constant dense<0.000000e+00> : vector<8xf32>
    %12 = vector.multi_reduction <add>, %11, %cst_7 [1] : vector<8x16xf32> to vector<8xf32>
    %13 = vector.shape_cast %12 : vector<8xf32> to vector<8x1xf32>
    %cst_8 = arith.constant 0.000000e+00 : f32
    %14 = vector.broadcast %cst_8 : f32 to vector<8x16xf32>
    %15 = arith.select %3, %9, %14 : vector<8x16xi1>, vector<8x16xf32>
    %cst_9 = arith.constant dense<0.000000e+00> : vector<8xf32>
    %16 = vector.multi_reduction <add>, %15, %cst_9 [1] : vector<8x16xf32> to vector<8xf32>
    %17 = vector.shape_cast %16 : vector<8xf32> to vector<8x1xf32>
    %cst_10 = arith.constant dense<0xFF800000> : vector<8xf32>
    %18 = vector.multi_reduction <maximumf>, %9, %cst_10 [1] : vector<8x16xf32> to vector<8xf32>
    %19 = vector.shape_cast %18 : vector<8xf32> to vector<8x1xf32>
    %20 = vector.broadcast %19 : vector<8x1xf32> to vector<8x16xf32>
    %21 = arith.subf %9, %20 : vector<8x16xf32>
    %22 = math.exp %21 : vector<8x16xf32>
    %cst_11 = arith.constant dense<0.000000e+00> : vector<8xf32>
    %23 = vector.multi_reduction <add>, %22, %cst_11 [1] : vector<8x16xf32> to vector<8xf32>
    %24 = vector.shape_cast %23 : vector<8xf32> to vector<8x1xf32>
    %25 = math.log %24 : vector<8x1xf32>
    %26 = arith.addf %19, %25 : vector<8x1xf32>
    %cst_12 = arith.constant 0.0333333351 : f32
    %27 = vector.broadcast %cst_12 : f32 to vector<8x1xf32>
    %28 = arith.mulf %13, %27 : vector<8x1xf32>
    %29 = math.absf %28 : vector<8x1xf32>
    %cst_13 = arith.constant -0.0012624911 : f32
    %30 = vector.broadcast %cst_13 : f32 to vector<8x1xf32>
    %31 = arith.mulf %30, %29 : vector<8x1xf32>
    %cst_14 = arith.constant 6.670090e-03 : f32
    %32 = vector.broadcast %cst_14 : f32 to vector<8x1xf32>
    %33 = arith.addf %31, %32 : vector<8x1xf32>
    %34 = arith.mulf %33, %29 : vector<8x1xf32>
    %cst_15 = arith.constant -0.0170881264 : f32
    %35 = vector.broadcast %cst_15 : f32 to vector<8x1xf32>
    %36 = arith.addf %34, %35 : vector<8x1xf32>
    %37 = arith.mulf %36, %29 : vector<8x1xf32>
    %cst_16 = arith.constant 0.0308918804 : f32
    %38 = vector.broadcast %cst_16 : f32 to vector<8x1xf32>
    %39 = arith.addf %37, %38 : vector<8x1xf32>
    %40 = arith.mulf %39, %29 : vector<8x1xf32>
    %cst_17 = arith.constant -0.0501743034 : f32
    %41 = vector.broadcast %cst_17 : f32 to vector<8x1xf32>
    %42 = arith.addf %40, %41 : vector<8x1xf32>
    %43 = arith.mulf %42, %29 : vector<8x1xf32>
    %cst_18 = arith.constant 0.0889789909 : f32
    %44 = vector.broadcast %cst_18 : f32 to vector<8x1xf32>
    %45 = arith.addf %43, %44 : vector<8x1xf32>
    %46 = arith.mulf %45, %29 : vector<8x1xf32>
    %cst_19 = arith.constant -0.214598805 : f32
    %47 = vector.broadcast %cst_19 : f32 to vector<8x1xf32>
    %48 = arith.addf %46, %47 : vector<8x1xf32>
    %49 = arith.mulf %48, %29 : vector<8x1xf32>
    %cst_20 = arith.constant 1.57079625 : f32
    %50 = vector.broadcast %cst_20 : f32 to vector<8x1xf32>
    %51 = arith.addf %49, %50 : vector<8x1xf32>
    %cst_21 = arith.constant 1.000000e+00 : f32
    %52 = vector.broadcast %cst_21 : f32 to vector<8x1xf32>
    %53 = arith.subf %52, %29 : vector<8x1xf32>
    %cst_22 = arith.constant 0.000000e+00 : f32
    %54 = vector.broadcast %cst_22 : f32 to vector<8x1xf32>
    %55 = arith.maximumf %53, %54 : vector<8x1xf32>
    %56 = math.sqrt %55 : vector<8x1xf32>
    %57 = arith.mulf %56, %51 : vector<8x1xf32>
    %cst_23 = arith.constant 0.000000e+00 : f32
    %58 = vector.broadcast %cst_23 : f32 to vector<8x1xf32>
    %59 = arith.cmpf olt, %28, %58 : vector<8x1xf32>
    %cst_24 = arith.constant 3.14159274 : f32
    %60 = vector.broadcast %cst_24 : f32 to vector<8x1xf32>
    %61 = arith.subf %60, %57 : vector<8x1xf32>
    %62 = arith.select %59, %61, %57 : vector<8x1xi1>, vector<8x1xf32>
    %63 = arith.subf %26, %17 : vector<8x1xf32>
    %c1 = arith.constant 1 : index
    %c0_25 = arith.constant 0 : index
    %c0_26 = arith.constant 0 : index
    %64 = vector.load %arg2[%c1, %c0_25, %c0_26] : memref<3x8x16xf32, #tpu.memory_space<vmem>>, vector<1x8x16xf32>
    %65 = vector.shape_cast %64 : vector<1x8x16xf32> to vector<8x16xf32>
    %c1_27 = arith.constant 1 : index
    %c0_28 = arith.constant 0 : index
    %c0_29 = arith.constant 0 : index
    %66 = vector.load %arg3[%c1_27, %c0_28, %c0_29] : memref<3x1x16xf32, #tpu.memory_space<vmem>>, vector<1x1x16xf32>
    %67 = vector.shape_cast %66 : vector<1x1x16xf32> to vector<1x16xf32>
    %68 = vector.broadcast %67 : vector<1x16xf32> to vector<8x16xf32>
    %69 = arith.addf %65, %68 : vector<8x16xf32>
    %cst_30 = arith.constant 0.000000e+00 : f32
    %70 = vector.broadcast %cst_30 : f32 to vector<8x16xf32>
    %71 = arith.select %3, %65, %70 : vector<8x16xi1>, vector<8x16xf32>
    %cst_31 = arith.constant dense<0.000000e+00> : vector<8xf32>
    %72 = vector.multi_reduction <add>, %71, %cst_31 [1] : vector<8x16xf32> to vector<8xf32>
    %73 = vector.shape_cast %72 : vector<8xf32> to vector<8x1xf32>
    %cst_32 = arith.constant 0.000000e+00 : f32
    %74 = vector.broadcast %cst_32 : f32 to vector<8x16xf32>
    %75 = arith.select %3, %69, %74 : vector<8x16xi1>, vector<8x16xf32>
    %cst_33 = arith.constant dense<0.000000e+00> : vector<8xf32>
    %76 = vector.multi_reduction <add>, %75, %cst_33 [1] : vector<8x16xf32> to vector<8xf32>
    %77 = vector.shape_cast %76 : vector<8xf32> to vector<8x1xf32>
    %cst_34 = arith.constant dense<0xFF800000> : vector<8xf32>
    %78 = vector.multi_reduction <maximumf>, %69, %cst_34 [1] : vector<8x16xf32> to vector<8xf32>
    %79 = vector.shape_cast %78 : vector<8xf32> to vector<8x1xf32>
    %80 = vector.broadcast %79 : vector<8x1xf32> to vector<8x16xf32>
    %81 = arith.subf %69, %80 : vector<8x16xf32>
    %82 = math.exp %81 : vector<8x16xf32>
    %cst_35 = arith.constant dense<0.000000e+00> : vector<8xf32>
    %83 = vector.multi_reduction <add>, %82, %cst_35 [1] : vector<8x16xf32> to vector<8xf32>
    %84 = vector.shape_cast %83 : vector<8xf32> to vector<8x1xf32>
    %85 = math.log %84 : vector<8x1xf32>
    %86 = arith.addf %79, %85 : vector<8x1xf32>
    %cst_36 = arith.constant 0.0333333351 : f32
    %87 = vector.broadcast %cst_36 : f32 to vector<8x1xf32>
    %88 = arith.mulf %73, %87 : vector<8x1xf32>
    %89 = math.absf %88 : vector<8x1xf32>
    %cst_37 = arith.constant -0.0012624911 : f32
    %90 = vector.broadcast %cst_37 : f32 to vector<8x1xf32>
    %91 = arith.mulf %90, %89 : vector<8x1xf32>
    %cst_38 = arith.constant 6.670090e-03 : f32
    %92 = vector.broadcast %cst_38 : f32 to vector<8x1xf32>
    %93 = arith.addf %91, %92 : vector<8x1xf32>
    %94 = arith.mulf %93, %89 : vector<8x1xf32>
    %cst_39 = arith.constant -0.0170881264 : f32
    %95 = vector.broadcast %cst_39 : f32 to vector<8x1xf32>
    %96 = arith.addf %94, %95 : vector<8x1xf32>
    %97 = arith.mulf %96, %89 : vector<8x1xf32>
    %cst_40 = arith.constant 0.0308918804 : f32
    %98 = vector.broadcast %cst_40 : f32 to vector<8x1xf32>
    %99 = arith.addf %97, %98 : vector<8x1xf32>
    %100 = arith.mulf %99, %89 : vector<8x1xf32>
    %cst_41 = arith.constant -0.0501743034 : f32
    %101 = vector.broadcast %cst_41 : f32 to vector<8x1xf32>
    %102 = arith.addf %100, %101 : vector<8x1xf32>
    %103 = arith.mulf %102, %89 : vector<8x1xf32>
    %cst_42 = arith.constant 0.0889789909 : f32
    %104 = vector.broadcast %cst_42 : f32 to vector<8x1xf32>
    %105 = arith.addf %103, %104 : vector<8x1xf32>
    %106 = arith.mulf %105, %89 : vector<8x1xf32>
    %cst_43 = arith.constant -0.214598805 : f32
    %107 = vector.broadcast %cst_43 : f32 to vector<8x1xf32>
    %108 = arith.addf %106, %107 : vector<8x1xf32>
    %109 = arith.mulf %108, %89 : vector<8x1xf32>
    %cst_44 = arith.constant 1.57079625 : f32
    %110 = vector.broadcast %cst_44 : f32 to vector<8x1xf32>
    %111 = arith.addf %109, %110 : vector<8x1xf32>
    %cst_45 = arith.constant 1.000000e+00 : f32
    %112 = vector.broadcast %cst_45 : f32 to vector<8x1xf32>
    %113 = arith.subf %112, %89 : vector<8x1xf32>
    %cst_46 = arith.constant 0.000000e+00 : f32
    %114 = vector.broadcast %cst_46 : f32 to vector<8x1xf32>
    %115 = arith.maximumf %113, %114 : vector<8x1xf32>
    %116 = math.sqrt %115 : vector<8x1xf32>
    %117 = arith.mulf %116, %111 : vector<8x1xf32>
    %cst_47 = arith.constant 0.000000e+00 : f32
    %118 = vector.broadcast %cst_47 : f32 to vector<8x1xf32>
    %119 = arith.cmpf olt, %88, %118 : vector<8x1xf32>
    %cst_48 = arith.constant 3.14159274 : f32
    %120 = vector.broadcast %cst_48 : f32 to vector<8x1xf32>
    %121 = arith.subf %120, %117 : vector<8x1xf32>
    %122 = arith.select %119, %121, %117 : vector<8x1xi1>, vector<8x1xf32>
    %123 = arith.subf %86, %77 : vector<8x1xf32>
    %c2 = arith.constant 2 : index
    %c0_49 = arith.constant 0 : index
    %c0_50 = arith.constant 0 : index
    %124 = vector.load %arg2[%c2, %c0_49, %c0_50] : memref<3x8x16xf32, #tpu.memory_space<vmem>>, vector<1x8x16xf32>
    %125 = vector.shape_cast %124 : vector<1x8x16xf32> to vector<8x16xf32>
    %c2_51 = arith.constant 2 : index
    %c0_52 = arith.constant 0 : index
    %c0_53 = arith.constant 0 : index
    %126 = vector.load %arg3[%c2_51, %c0_52, %c0_53] : memref<3x1x16xf32, #tpu.memory_space<vmem>>, vector<1x1x16xf32>
    %127 = vector.shape_cast %126 : vector<1x1x16xf32> to vector<1x16xf32>
    %128 = vector.broadcast %127 : vector<1x16xf32> to vector<8x16xf32>
    %129 = arith.addf %125, %128 : vector<8x16xf32>
    %cst_54 = arith.constant 0.000000e+00 : f32
    %130 = vector.broadcast %cst_54 : f32 to vector<8x16xf32>
    %131 = arith.select %3, %125, %130 : vector<8x16xi1>, vector<8x16xf32>
    %cst_55 = arith.constant dense<0.000000e+00> : vector<8xf32>
    %132 = vector.multi_reduction <add>, %131, %cst_55 [1] : vector<8x16xf32> to vector<8xf32>
    %133 = vector.shape_cast %132 : vector<8xf32> to vector<8x1xf32>
    %cst_56 = arith.constant 0.000000e+00 : f32
    %134 = vector.broadcast %cst_56 : f32 to vector<8x16xf32>
    %135 = arith.select %3, %129, %134 : vector<8x16xi1>, vector<8x16xf32>
    %cst_57 = arith.constant dense<0.000000e+00> : vector<8xf32>
    %136 = vector.multi_reduction <add>, %135, %cst_57 [1] : vector<8x16xf32> to vector<8xf32>
    %137 = vector.shape_cast %136 : vector<8xf32> to vector<8x1xf32>
    %cst_58 = arith.constant dense<0xFF800000> : vector<8xf32>
    %138 = vector.multi_reduction <maximumf>, %129, %cst_58 [1] : vector<8x16xf32> to vector<8xf32>
    %139 = vector.shape_cast %138 : vector<8xf32> to vector<8x1xf32>
    %140 = vector.broadcast %139 : vector<8x1xf32> to vector<8x16xf32>
    %141 = arith.subf %129, %140 : vector<8x16xf32>
    %142 = math.exp %141 : vector<8x16xf32>
    %cst_59 = arith.constant dense<0.000000e+00> : vector<8xf32>
    %143 = vector.multi_reduction <add>, %142, %cst_59 [1] : vector<8x16xf32> to vector<8xf32>
    %144 = vector.shape_cast %143 : vector<8xf32> to vector<8x1xf32>
    %145 = math.log %144 : vector<8x1xf32>
    %146 = arith.addf %139, %145 : vector<8x1xf32>
    %cst_60 = arith.constant 0.0333333351 : f32
    %147 = vector.broadcast %cst_60 : f32 to vector<8x1xf32>
    %148 = arith.mulf %133, %147 : vector<8x1xf32>
    %149 = math.absf %148 : vector<8x1xf32>
    %cst_61 = arith.constant -0.0012624911 : f32
    %150 = vector.broadcast %cst_61 : f32 to vector<8x1xf32>
    %151 = arith.mulf %150, %149 : vector<8x1xf32>
    %cst_62 = arith.constant 6.670090e-03 : f32
    %152 = vector.broadcast %cst_62 : f32 to vector<8x1xf32>
    %153 = arith.addf %151, %152 : vector<8x1xf32>
    %154 = arith.mulf %153, %149 : vector<8x1xf32>
    %cst_63 = arith.constant -0.0170881264 : f32
    %155 = vector.broadcast %cst_63 : f32 to vector<8x1xf32>
    %156 = arith.addf %154, %155 : vector<8x1xf32>
    %157 = arith.mulf %156, %149 : vector<8x1xf32>
    %cst_64 = arith.constant 0.0308918804 : f32
    %158 = vector.broadcast %cst_64 : f32 to vector<8x1xf32>
    %159 = arith.addf %157, %158 : vector<8x1xf32>
    %160 = arith.mulf %159, %149 : vector<8x1xf32>
    %cst_65 = arith.constant -0.0501743034 : f32
    %161 = vector.broadcast %cst_65 : f32 to vector<8x1xf32>
    %162 = arith.addf %160, %161 : vector<8x1xf32>
    %163 = arith.mulf %162, %149 : vector<8x1xf32>
    %cst_66 = arith.constant 0.0889789909 : f32
    %164 = vector.broadcast %cst_66 : f32 to vector<8x1xf32>
    %165 = arith.addf %163, %164 : vector<8x1xf32>
    %166 = arith.mulf %165, %149 : vector<8x1xf32>
    %cst_67 = arith.constant -0.214598805 : f32
    %167 = vector.broadcast %cst_67 : f32 to vector<8x1xf32>
    %168 = arith.addf %166, %167 : vector<8x1xf32>
    %169 = arith.mulf %168, %149 : vector<8x1xf32>
    %cst_68 = arith.constant 1.57079625 : f32
    %170 = vector.broadcast %cst_68 : f32 to vector<8x1xf32>
    %171 = arith.addf %169, %170 : vector<8x1xf32>
    %cst_69 = arith.constant 1.000000e+00 : f32
    %172 = vector.broadcast %cst_69 : f32 to vector<8x1xf32>
    %173 = arith.subf %172, %149 : vector<8x1xf32>
    %cst_70 = arith.constant 0.000000e+00 : f32
    %174 = vector.broadcast %cst_70 : f32 to vector<8x1xf32>
    %175 = arith.maximumf %173, %174 : vector<8x1xf32>
    %176 = math.sqrt %175 : vector<8x1xf32>
    %177 = arith.mulf %176, %171 : vector<8x1xf32>
    %cst_71 = arith.constant 0.000000e+00 : f32
    %178 = vector.broadcast %cst_71 : f32 to vector<8x1xf32>
    %179 = arith.cmpf olt, %148, %178 : vector<8x1xf32>
    %cst_72 = arith.constant 3.14159274 : f32
    %180 = vector.broadcast %cst_72 : f32 to vector<8x1xf32>
    %181 = arith.subf %180, %177 : vector<8x1xf32>
    %182 = arith.select %179, %181, %177 : vector<8x1xi1>, vector<8x1xf32>
    %183 = arith.subf %146, %137 : vector<8x1xf32>
    %184 = tpu.concatenate %62, %122, %182 in 1 : vector<8x1xf32>, vector<8x1xf32>, vector<8x1xf32> -> vector<8x3xf32>
    %c0_73 = arith.constant 0 : index
    %c0_74 = arith.constant 0 : index
    %185 = vector.load %arg4[%c0_73, %c0_74] : memref<8x3xf32, #tpu.memory_space<vmem>>, vector<8x3xf32>
    tpu.vector_store %arg4[%c0_73, %c0_74], %184 {strides = array<i32>} : memref<8x3xf32, #tpu.memory_space<vmem>>, vector<8x3xf32>,
    %186 = tpu.concatenate %63, %123, %183 in 1 : vector<8x1xf32>, vector<8x1xf32>, vector<8x1xf32> -> vector<8x3xf32>
    %c0_75 = arith.constant 0 : index
    %c0_76 = arith.constant 0 : index
    %187 = vector.load %arg5[%c0_75, %c0_76] : memref<8x3xf32, #tpu.memory_space<vmem>>, vector<8x3xf32>
    tpu.vector_store %arg5[%c0_75, %c0_76], %186 {strides = array<i32>} : memref<8x3xf32, #tpu.memory_space<vmem>>, vector<8x3xf32>,
    return
  }
  func.func @transform_0(%arg0: i32) -> (i32, i32) {
    %c0_i32 = arith.constant 0 : i32
    %c0_i32_0 = arith.constant 0 : i32
    return %arg0, %c0_i32 : i32, i32
  }
  func.func @transform_1(%arg0: i32) -> (i32, i32, i32) {
    %c0_i32 = arith.constant 0 : i32
    %c0_i32_0 = arith.constant 0 : i32
    %c0_i32_1 = arith.constant 0 : i32
    return %c0_i32, %arg0, %c0_i32_0 : i32, i32, i32
  }
  func.func @transform_2(%arg0: i32) -> (i32, i32, i32) {
    %c0_i32 = arith.constant 0 : i32
    %c0_i32_0 = arith.constant 0 : i32
    %c0_i32_1 = arith.constant 0 : i32
    %c0_i32_2 = arith.constant 0 : i32
    return %c0_i32, %c0_i32_0, %c0_i32_1 : i32, i32, i32
  }
  func.func @transform_3(%arg0: i32) -> (i32, i32) {
    %c0_i32 = arith.constant 0 : i32
    %c0_i32_0 = arith.constant 0 : i32
    return %arg0, %c0_i32 : i32, i32
  }
  func.func @transform_4(%arg0: i32) -> (i32, i32) {
    %c0_i32 = arith.constant 0 : i32
    %c0_i32_0 = arith.constant 0 : i32
    return %arg0, %c0_i32 : i32, i32
  }
}

</mosaic_0001>

<llo_original>
// kernel: tpu_custom_call.1
$region0: #{tpu_custom_call.1}
  #allocation0 [shape = 'u32[]', space=smem, size = 0x4, offset = 0x4, fixed_abs, tag = 'smem constant byte address 0x4 - core index']
  #allocation1 [shape = 'u32[144,128]{1,0:T(1,128)}', space=vmem, size = 0x12000, scoped, tag = 'internal scratch']
  %s0 = inlined_call_operand.vmem [shape: s32[8,1], index: 0, kind: input, shape index: {}]
  %s1 = inlined_call_operand.hbm [shape: f32[3,8,16], index: 1, kind: input, shape index: {}]
  %s2 = inlined_call_operand.vmem [shape: f32[3,1,16], index: 2, kind: input, shape index: {}]
  %s3 = inlined_call_operand.vmem [shape: f32[8,3], index: 3, kind: output, shape index: {0}]
  %s4 = inlined_call_operand.vmem [shape: f32[8,3], index: 4, kind: output, shape index: {1}]
  %5 = xla_tuple %s3, %s4
  %s6 = sld [smem:[#allocation0]]
  $region34: #{tpu_custom_call.1} parent=0
    _
  %s8 = ssub.s32 1, %s6
  %s9 = scalar_select 0, %s8, %s6
  $region1: #{tpu_custom_call.1} parent=0
    #allocation2 [shape = 'u8[12288]{0}', space=vmem, size = 0x3000, scoped, tag = 'input window, operand 1, single buffered']
    #allocation3 [shape = 's32[1]{0}', space=sflag, size = 0x4, scoped, tag = 'scoped memory for tpu_custom_call.1']
    %10 = vsyncpa [#allocation3], 0
    // Predicated region
    $region2: #{tpu_custom_call.1} parent=1 // pred_check
      _
    $region3: #{tpu_custom_call.1} parent=1 // pred_check_branch
      %12 = sbr.rel (0) target = $region5
    $region4: #{tpu_custom_call.1} parent=1 // pred_region
      _
    $region5: #{tpu_custom_call.1} parent=1 // pred_fallthru
      _
    // Predicated region
    $region6: #{tpu_custom_call.1} parent=1 // pred_check
      _
    $region7: #{tpu_custom_call.1} parent=1 // pred_check_branch
      %14 = sbr.rel (0) target = $region9
    $region8: #{tpu_custom_call.1} parent=1 // pred_region
      %s16 = ssub.s32 384, 384
      %17 = vsyncadd [#allocation3], %s16
      %s18 = sshll.u32 [#allocation2], 4
      %s19 = int_to_ptr.vmem [resolvable:$true] %s18
      %24 = dma.hbm_to_vmem [thread:$0]  %s1, 384, %s19, [#allocation3], 128, 128, 8
    $region9: #{tpu_custom_call.1} parent=1 // pred_fallthru
      _
    // Predicated region
    $region10: #{tpu_custom_call.1} parent=1 // pred_check
      _
    $region11: #{tpu_custom_call.1} parent=1 // pred_check_branch
      %26 = sbr.rel (0) target = $region13
    $region12: #{tpu_custom_call.1} parent=1 // pred_region
      _
    $region13: #{tpu_custom_call.1} parent=1 // pred_fallthru
      _
    // Predicated region
    $region14: #{tpu_custom_call.1} parent=1 // pred_check
      _
    $region15: #{tpu_custom_call.1} parent=1 // pred_check_branch
      %28 = sbr.rel (0) target = $region17
    $region16: #{tpu_custom_call.1} parent=1 // pred_region
      %29 = dma.done [#allocation3], 384
    $region17: #{tpu_custom_call.1} parent=1 // pred_fallthru
      _
    %v30 = vld [vmem:[%s0] sm:$0xff]
    %v31 = vlaneseq
    %v32 = vand.u32 %v31, 127
    %33 = vset.pattern.permute.xlu0 0
    %34 = vperm.xlu0 %33, %v30
    %v35 = vpop.permute.xlu0 %34
    %vm36 = vcmp.eq.s32.totalorder %v32, %v35
    %v37 = vld [vmem:[#allocation2] sm:$0xff]
    %v38 = vld [vmem:[%s2] sm:$0x1]
    %v40 = vlaneseq
    %v41 = vshrl.u32 %v40, 7
    %v42 = vsub.s32 0, %v41
    %v43 = vrot.slane %v38, %v42
    %v45 = vadd.f32 %v37, %v43
    %v46 = vsel %vm36, %v37, 0.0
    %vm47 = vcmask 130048
    %v48 = vsel %vm47, %v46, 0.0
    %49 = vadd.xlane.f32.xlu0 %v48
    %v50 = vpop.xlane.xlu0 %49
    %v51 = vsel %vm36, %v45, 0.0
    %v52 = vsel %vm47, %v51, 0.0
    %53 = vadd.xlane.f32.xlu0 %v52
    %v54 = vpop.xlane.xlu0 %53
    %v55 = vsel %vm47, %v45, -inf
    %56 = vmax.xlane.f32.xlu0 %v55
    %v57 = vpop.xlane.xlu0 %56
    %v58 = vsub.f32 %v45, %v57
    %v59 = vmul.f32 %v58, 1.442695
    %v60 = vpow.pop %v59
    %v61 = vsel %vm47, %v60, 0.0
    %62 = vadd.xlane.f32.xlu0 %v61
    %v63 = vpop.xlane.xlu0 %62
    %v64 = vlog2.pop %v63
    %v65 = vmul.f32 %v64, 0.6931472
    %v66 = vadd.f32 %v57, %v65
    %v67 = vmul.f32 %v50, 0.033333335
    %v68 = vand.u32 2147483647, %v67
    %v69 = vmul.f32 %v68, -0.0012624911
    %v70 = vadd.f32 %v69, 0.00667009
    %v71 = vmul.f32 %v70, %v68
    %v72 = vadd.f32 %v71, -0.017088126
    %v73 = vmul.f32 %v72, %v68
    %v74 = vadd.f32 %v73, 0.03089188
    %v75 = vmul.f32 %v74, %v68
    %v76 = vadd.f32 %v75, -0.050174303
    %v77 = vmul.f32 %v76, %v68
    %v78 = vadd.f32 %v77, 0.08897899
    %v79 = vmul.f32 %v78, %v68
    %v80 = vadd.f32 %v79, -0.2145988
    %v81 = vmul.f32 %v80, %v68
    %v82 = vadd.f32 %v81, 1.5707963
    %v83 = vsub.f32 1.0, %v68
    %v84 = vmax.f32 %v83, 0.0
    %v85 = vrsqrt.pop %v84
    %v86 = vmul.f32 %v84, %v85
    %vm87 = vcmp.eq.f32.partialorder %v84, inf
    %v88 = vsel %vm87, %v84, %v86
    %vm89 = vcmp.eq.f32.partialorder %v84, 0.0
    %v90 = vand.u32 %v84, 2147483648
    %v91 = vsel %vm89, %v90, %v88
    %v92 = vmul.f32 %v91, %v82
    %vm93 = vcmp.lt.f32.partialorder %v67, 0.0
    %v94 = vsub.f32 3.1415927, %v92
    %v95 = vsel %vm93, %v94, %v92
    %v96 = vsub.f32 %v66, %v54
    %s97 = scalar_lea.vmem [#allocation2], 8
    %v98 = vld [vmem:[%s97] sm:$0xff]
    %s99 = scalar_lea.vmem %s2, 1
    %v100 = vld [vmem:[%s99] sm:$0x1]
    %v102 = vlaneseq
    %v103 = vshrl.u32 %v102, 7
    %v104 = vsub.s32 0, %v103
    %v105 = vrot.slane %v100, %v104
    %v107 = vadd.f32 %v98, %v105
    %v108 = vsel %vm36, %v98, 0.0
    %v109 = vsel %vm47, %v108, 0.0
    %110 = vadd.xlane.f32.xlu0 %v109
    %v111 = vpop.xlane.xlu0 %110
    %v112 = vsel %vm36, %v107, 0.0
    %v113 = vsel %vm47, %v112, 0.0
    %114 = vadd.xlane.f32.xlu0 %v113
    %v115 = vpop.xlane.xlu0 %114
    %v116 = vsel %vm47, %v107, -inf
    %117 = vmax.xlane.f32.xlu0 %v116
    %v118 = vpop.xlane.xlu0 %117
    %v119 = vsub.f32 %v107, %v118
    %v120 = vmul.f32 %v119, 1.442695
    %v121 = vpow.pop %v120
    %v122 = vsel %vm47, %v121, 0.0
    %123 = vadd.xlane.f32.xlu0 %v122
    %v124 = vpop.xlane.xlu0 %123
    %v125 = vlog2.pop %v124
    %v126 = vmul.f32 %v125, 0.6931472
    %v127 = vadd.f32 %v118, %v126
    %v128 = vmul.f32 %v111, 0.033333335
    %v129 = vand.u32 2147483647, %v128
    %v130 = vmul.f32 %v129, -0.0012624911
    %v131 = vadd.f32 %v130, 0.00667009
    %v132 = vmul.f32 %v131, %v129
    %v133 = vadd.f32 %v132, -0.017088126
    %v134 = vmul.f32 %v133, %v129
    %v135 = vadd.f32 %v134, 0.03089188
    %v136 = vmul.f32 %v135, %v129
    %v137 = vadd.f32 %v136, -0.050174303
    %v138 = vmul.f32 %v137, %v129
    %v139 = vadd.f32 %v138, 0.08897899
    %v140 = vmul.f32 %v139, %v129
    %v141 = vadd.f32 %v140, -0.2145988
    %v142 = vmul.f32 %v141, %v129
    %v143 = vadd.f32 %v142, 1.5707963
    %v144 = vsub.f32 1.0, %v129
    %v145 = vmax.f32 %v144, 0.0
    %v146 = vrsqrt.pop %v145
    %v147 = vmul.f32 %v145, %v146
    %vm148 = vcmp.eq.f32.partialorder %v145, inf
    %v149 = vsel %vm148, %v145, %v147
    %vm150 = vcmp.eq.f32.partialorder %v145, 0.0
    %v151 = vand.u32 %v145, 2147483648
    %v152 = vsel %vm150, %v151, %v149
    %v153 = vmul.f32 %v152, %v143
    %vm154 = vcmp.lt.f32.partialorder %v128, 0.0
    %v155 = vsub.f32 3.1415927, %v153
    %v156 = vsel %vm154, %v155, %v153
    %v157 = vsub.f32 %v127, %v115
    %s158 = scalar_lea.vmem [#allocation2], 16
    %v159 = vld [vmem:[%s158] sm:$0xff]
    %s160 = scalar_lea.vmem %s2, 2
    %v161 = vld [vmem:[%s160] sm:$0x1]
    %v163 = vlaneseq
    %v164 = vshrl.u32 %v163, 7
    %v165 = vsub.s32 0, %v164
    %v166 = vrot.slane %v161, %v165
    %v168 = vadd.f32 %v159, %v166
    %v169 = vsel %vm36, %v159, 0.0
    %v170 = vsel %vm47, %v169, 0.0
    %171 = vadd.xlane.f32.xlu0 %v170
    %v172 = vpop.xlane.xlu0 %171
    %v173 = vsel %vm36, %v168, 0.0
    %v174 = vsel %vm47, %v173, 0.0
    %175 = vadd.xlane.f32.xlu0 %v174
    %v176 = vpop.xlane.xlu0 %175
    %v177 = vsel %vm47, %v168, -inf
    %178 = vmax.xlane.f32.xlu0 %v177
    %v179 = vpop.xlane.xlu0 %178
    %v180 = vsub.f32 %v168, %v179
    %v181 = vmul.f32 %v180, 1.442695
    %v182 = vpow.pop %v181
    %v183 = vsel %vm47, %v182, 0.0
    %184 = vadd.xlane.f32.xlu0 %v183
    %v185 = vpop.xlane.xlu0 %184
    %v186 = vlog2.pop %v185
    %v187 = vmul.f32 %v186, 0.6931472
    %v188 = vadd.f32 %v179, %v187
    %v189 = vmul.f32 %v172, 0.033333335
    %v190 = vand.u32 2147483647, %v189
    %v191 = vmul.f32 %v190, -0.0012624911
    %v192 = vadd.f32 %v191, 0.00667009
    %v193 = vmul.f32 %v192, %v190
    %v194 = vadd.f32 %v193, -0.017088126
    %v195 = vmul.f32 %v194, %v190
    %v196 = vadd.f32 %v195, 0.03089188
    %v197 = vmul.f32 %v196, %v190
    %v198 = vadd.f32 %v197, -0.050174303
    %v199 = vmul.f32 %v198, %v190
    %v200 = vadd.f32 %v199, 0.08897899
    %v201 = vmul.f32 %v200, %v190
    %v202 = vadd.f32 %v201, -0.2145988
    %v203 = vmul.f32 %v202, %v190
    %v204 = vadd.f32 %v203, 1.5707963
    %v205 = vsub.f32 1.0, %v190
    %v206 = vmax.f32 %v205, 0.0
    %v207 = vrsqrt.pop %v206
    %v208 = vmul.f32 %v206, %v207
    %vm209 = vcmp.eq.f32.partialorder %v206, inf
    %v210 = vsel %vm209, %v206, %v208
    %vm211 = vcmp.eq.f32.partialorder %v206, 0.0
    %v212 = vand.u32 %v206, 2147483648
    %v213 = vsel %vm211, %v212, %v210
    %v214 = vmul.f32 %v213, %v204
    %vm215 = vcmp.lt.f32.partialorder %v189, 0.0
    %v216 = vsub.f32 3.1415927, %v214
    %v217 = vsel %vm215, %v216, %v214
    %v218 = vsub.f32 %v188, %v176
    %vm219 = vcmask 7168
    %v220 = vsel %vm219, %v95, %v156
    %vm221 = vcmask 15360
    %v222 = vsel %vm221, %v220, %v217
    %vm223 = vcmask 23552
    %224 = vst.msk [vmem:[%s3] sm:$0xff] %vm223, %v222
    %v225 = vsel %vm219, %v96, %v157
    %v226 = vsel %vm221, %v225, %v218
    %227 = vst.msk [vmem:[%s4] sm:$0xff] %vm223, %v226
    // Predicated region
    $region18: #{tpu_custom_call.1} parent=1 // pred_check
      _
    $region19: #{tpu_custom_call.1} parent=1 // pred_check_branch
      %229 = sbr.rel (0) target = $region21
    $region20: #{tpu_custom_call.1} parent=1 // pred_region
      _
    $region21: #{tpu_custom_call.1} parent=1 // pred_fallthru
      _
    // Predicated region
    $region22: #{tpu_custom_call.1} parent=1 // pred_check
      _
    $region23: #{tpu_custom_call.1} parent=1 // pred_check_branch
      %231 = sbr.rel (0) target = $region25
    $region24: #{tpu_custom_call.1} parent=1 // pred_region
      _
    $region25: #{tpu_custom_call.1} parent=1 // pred_fallthru
      _
    // Predicated region
    $region26: #{tpu_custom_call.1} parent=1 // pred_check
      _
    $region27: #{tpu_custom_call.1} parent=1 // pred_check_branch
      %233 = sbr.rel (0) target = $region29
    $region28: #{tpu_custom_call.1} parent=1 // pred_region
      _
    $region29: #{tpu_custom_call.1} parent=1 // pred_fallthru
      _
    // Predicated region
    $region30: #{tpu_custom_call.1} parent=1 // pred_check
      _
    $region31: #{tpu_custom_call.1} parent=1 // pred_check_branch
      %235 = sbr.rel (0) target = $region33
    $region32: #{tpu_custom_call.1} parent=1 // pred_region
      _
    $region33: #{tpu_custom_call.1} parent=1 // pred_fallthru
      _
    %236 = vsyncpa [#allocation3], 1

</llo_original>
